<compile_context>
chip_gen: v5e
topology: v5e:2x2
jax: 0.10.0
libtpu: 0.0.40
codegen_flags: <defaults>
</compile_context>

<pallas_src>
import math
from typing import NamedTuple

import jax
import jax.numpy as jnp
from jax.experimental import pallas as pl
from jax.experimental.pallas import tpu as pltpu


def _round_up(x, m):
    return (x + m - 1) // m * m


def _sublane_multiple(dtype):
    # Sub-32-bit dtypes pack rows along sublanes: 16 rows/vreg for 2-byte, 32 for 1-byte.
    return {4: 8, 2: 16, 1: 32}.get(jnp.dtype(dtype).itemsize, 8)


# ---------------------------------------------------------------------------
# Kernels
# ---------------------------------------------------------------------------

def _softmax_epilogue(logits_f32, j, y_ref, logits_ref, m_ref, l_ref, t_ref):
    """Per-(i, j) epilogue: store the logits tile, update online logsumexp and the
    target-logit accumulator (flash-style across class tiles)."""
    logits_ref[...] = logits_f32.astype(logits_ref.dtype)     # lane-dense store

    tile_max = jnp.max(logits_f32, axis=-1, keepdims=True)     # [tm, 1]
    m_new = jnp.maximum(m_ref[...], tile_max)
    scale = jnp.exp(m_ref[...] - m_new)
    l_ref[...] = scale * l_ref[...] + jnp.sum(jnp.exp(logits_f32 - m_new),
                                              axis=-1, keepdims=True)
    m_ref[...] = m_new

    # Target logit: (1, tn) iota broadcast against [tm, 1] labels (no (tm, tn) int32
    # materialization).  The label falls in exactly one class tile; others contribute 0.
    tn = logits_f32.shape[-1]
    col_ids = jax.lax.broadcasted_iota(jnp.int32, (1, tn), 1) + j * tn
    t_ref[...] += jnp.sum(jnp.where(col_ids == y_ref[...], logits_f32, 0.0),
                          axis=-1, keepdims=True)


def _finalize(perex_ref, m_ref, l_ref, t_ref):
    perex_ref[...] = (m_ref[...] + jnp.log(l_ref[...]) - t_ref[...]
                      ).astype(perex_ref.dtype)


def _ce_kernel_fused_k(x_ref, w_ref, b_ref, y_ref,
                       logits_ref, perex_ref,
                       m_ref, l_ref, t_ref):
    """grid = (i over B tiles, j over C tiles); the whole H reduction in one jnp.dot."""
    j = pl.program_id(1)
    nj = pl.num_programs(1)

    @pl.when(j == 0)
    def _init_row_stats():
        m_ref[...] = jnp.full_like(m_ref, -jnp.inf)
        l_ref[...] = jnp.zeros_like(l_ref)
        t_ref[...] = jnp.zeros_like(t_ref)

    # Native-dtype operands on the MXU, f32 accumulation; no VMEM accumulator RMW.
    logits = (jnp.dot(x_ref[...], w_ref[...], preferred_element_type=jnp.float32)
              + b_ref[...].astype(jnp.float32))
    _softmax_epilogue(logits, j, y_ref, logits_ref, m_ref, l_ref, t_ref)

    @pl.when(j == nj - 1)
    def _fin():
        _finalize(perex_ref, m_ref, l_ref, t_ref)


def _ce_kernel_grid_k(x_ref, w_ref, b_ref, y_ref,
                      logits_ref, perex_ref,
                      acc_ref, m_ref, l_ref, t_ref):
    """grid = (i over B tiles, j over C tiles, k over H tiles); k fastest."""
    j = pl.program_id(1)
    k = pl.program_id(2)
    nj = pl.num_programs(1)
    nk = pl.num_programs(2)

    @pl.when(jnp.logical_and(j == 0, k == 0))
    def _init_row_stats():
        m_ref[...] = jnp.full_like(m_ref, -jnp.inf)
        l_ref[...] = jnp.zeros_like(l_ref)
        t_ref[...] = jnp.zeros_like(t_ref)

    @pl.when(k == 0)
    def _init_acc():
        acc_ref[...] = jnp.zeros_like(acc_ref)

    acc_ref[...] += jnp.dot(x_ref[...], w_ref[...],
                            preferred_element_type=jnp.float32)

    @pl.when(k == nk - 1)
    def _epilogue():
        logits = acc_ref[...] + b_ref[...].astype(jnp.float32)
        _softmax_epilogue(logits, j, y_ref, logits_ref, m_ref, l_ref, t_ref)

    @pl.when(jnp.logical_and(j == nj - 1, k == nk - 1))
    def _fin():
        _finalize(perex_ref, m_ref, l_ref, t_ref)


# ---------------------------------------------------------------------------
# Parameter preparation (run ONCE at init, off the hot path)
# ---------------------------------------------------------------------------

class PreparedClassifier(NamedTuple):
    w_p: jax.Array   # [H_pad, C_pad], padded (optionally bf16-cast)
    b_p: jax.Array   # [1, C_pad] f32, padded classes at -1e30
    H: int
    C: int
    H_pad: int
    C_pad: int
    tk: int
    tn: int


def prepare_classifier_params(weight, bias, *, tile_n=1024, tile_k=1024,
                              k_fuse_threshold=2048, weight_dtype=None):
    """Pad (and optionally cast) the classifier parameters once.

    weight is stored pre-transposed as [H, C].  Padded classes get a -1e30 bias so
    they vanish from the softmax.  Pass weight_dtype=jnp.bfloat16 to halve the
    dominant weight HBM stream (accumulation stays f32 inside the kernel).
    """
    H, C = weight.shape
    assert bias.shape == (C,)

    C_pad0 = _round_up(C, 128)
    tn = C_pad0 if C_pad0 <= tile_n else tile_n
    C_pad = _round_up(C_pad0, tn)

    H_pad0 = _round_up(H, 128)
    if H_pad0 <= k_fuse_threshold:
        tk, H_pad = H_pad0, H_pad0           # collapse the K grid axis entirely
    else:
        tk = min(tile_k, H_pad0)
        H_pad = _round_up(H_pad0, tk)

    if weight_dtype is not None:
        weight = weight.astype(weight_dtype)
    w_p = jnp.pad(weight, ((0, H_pad - H), (0, C_pad - C)))
    b_p = jnp.pad(bias.astype(jnp.float32).reshape(1, C),
                  ((0, 0), (0, C_pad - C)), constant_values=-1e30)
    # TODO(synk): if downstream consumers need float16 logits, -1e30 padded-class
    # logits overflow to -inf on the store cast (harmless after slicing).
    return PreparedClassifier(w_p, b_p, H, C, H_pad, C_pad, tk, tn)


# ---------------------------------------------------------------------------
# Forward (mirror of WrapperClassifier.forward)
# ---------------------------------------------------------------------------

def wrapper_classifier_forward(embeddings, attention_mask, labels, span_mask,
                               complementary_mask, to_duplicate, *, params,
                               tile_m=512):
    """Returns (loss, logits).  Only embeddings/labels participate (the other args
    are accepted and ignored, exactly like the PyTorch module)."""
    B, H = embeddings.shape
    assert H == params.H, "embeddings hidden dim must match prepared weight"

    # --- B tiling: pad to the dtype's sublane-packing multiple, then to tm ---
    sub = _sublane_multiple(embeddings.dtype)
    tile_m = _round_up(tile_m, sub)
    B_pad0 = _round_up(B, sub)
    tm = min(tile_m, B_pad0)          # cover B with as few i-tiles as possible
    B_pad = _round_up(B_pad0, tm)

    H_pad, C_pad, tk, tn = params.H_pad, params.C_pad, params.tk, params.tn
    nk = H_pad // tk

    x_p = jnp.pad(embeddings, ((0, B_pad - B), (0, H_pad - H)))
    # Padded batch rows get label 0 and a finite per-example loss; they are sliced
    # away before the mean and must never be consumed directly.
    y_p = jnp.pad(labels.astype(jnp.int32).reshape(B, 1), ((0, B_pad - B), (0, 0)))

    # --- VMEM budget from the actual tile footprint (double-buffered inputs/outputs
    #     + scratch), with headroom, capped safely below v7x's 64 MiB physical VMEM ---
    x_item = jnp.dtype(embeddings.dtype).itemsize
    w_item = jnp.dtype(params.w_p.dtype).itemsize
    vmem_est = 2 * (tm * tk * x_item + tk * tn * w_item + tn * 4
                    + tm * tn * x_item + tm * 128 * 4 + tm * 4)
    vmem_est += (tm * tn * 4 if nk > 1 else 0) + 3 * tm * 128 * 4
    vmem_limit = max(16 << 20, min(int(1.25 * vmem_est) + (4 << 20), 56 << 20))

    out_shape = (
        jax.ShapeDtypeStruct((B_pad, C_pad), embeddings.dtype),  # padded logits
        jax.ShapeDtypeStruct((B_pad, 1), jnp.float32),           # per-example CE
    )
    row_stats = [pltpu.VMEM((tm, 1), jnp.float32) for _ in range(3)]

    if nk == 1:
        grid = (B_pad // tm, C_pad // tn)
        in_specs = [
            pl.BlockSpec((tm, tk), lambda i, j: (i, 0)),   # embeddings tile
            pl.BlockSpec((tk, tn), lambda i, j: (0, j)),   # weight tile
            pl.BlockSpec((1, tn), lambda i, j: (0, j)),    # bias tile
            pl.BlockSpec((tm, 1), lambda i, j: (i, 0)),    # labels tile
        ]
        out_specs = [
            pl.BlockSpec((tm, tn), lambda i, j: (i, j)),   # logits tile
            pl.BlockSpec((tm, 1), lambda i, j: (i, 0)),    # per-example loss
        ]
        kernel = _ce_kernel_fused_k
        scratch = row_stats
        semantics = ("parallel", "arbitrary")
    else:
        grid = (B_pad // tm, C_pad // tn, nk)
        in_specs = [
            pl.BlockSpec((tm, tk), lambda i, j, k: (i, k)),
            pl.BlockSpec((tk, tn), lambda i, j, k: (k, j)),
            pl.BlockSpec((1, tn), lambda i, j, k: (0, j)),
            pl.BlockSpec((tm, 1), lambda i, j, k: (i, 0)),
        ]
        out_specs = [
            pl.BlockSpec((tm, tn), lambda i, j, k: (i, j)),
            pl.BlockSpec((tm, 1), lambda i, j, k: (i, 0)),
        ]
        kernel = _ce_kernel_grid_k
        scratch = [pltpu.VMEM((tm, tn), jnp.float32)] + row_stats
        semantics = ("parallel", "arbitrary", "arbitrary")

    logits_p, per_example = pl.pallas_call(
        kernel,
        out_shape=out_shape,
        grid_spec=pltpu.PrefetchScalarGridSpec(
            num_scalar_prefetch=0,
            grid=grid,
            in_specs=in_specs,
            out_specs=out_specs,
            scratch_shapes=scratch,
        ),
        compiler_params=pltpu.CompilerParams(
            dimension_semantics=semantics,
            vmem_limit_bytes=vmem_limit,
        ),
    )(x_p, params.w_p, params.b_p, y_p)

    logits = logits_p[:B, :params.C]
    loss = jnp.sum(per_example[:B, 0]) / float(B)
    # TODO(synk): the PyTorch module computes the loss on CPU (`logits.cpu()`);
    # that device transfer has no meaning here — the loss value is identical.
    return loss, logits


# ---------------------------------------------------------------------------
# Self-test
# ---------------------------------------------------------------------------

if __name__ == "__main__":
    def run_check(B, H, C, **prep_kwargs):
        key = jax.random.PRNGKey(0)
        k_emb, k_w, k_b, k_lbl = jax.random.split(key, 4)

        embeddings = jax.random.normal(k_emb, (B, H), dtype=jnp.float32)
        labels = jax.random.randint(k_lbl, (B,), 0, C, dtype=jnp.int32)

        # nn.Linear-style init (U(-1/sqrt(H), 1/sqrt(H))), stored as [H, C].
        bound = 1.0 / math.sqrt(H)
        weight = jax.random.uniform(k_w, (H, C), minval=-bound, maxval=bound,
                                    dtype=jnp.float32)
        bias = jax.random.uniform(k_b, (C,), minval=-bound, maxval=bound,
                                  dtype=jnp.float32)

        # Pad/cast the parameters ONCE (off the per-call hot path).
        params = prepare_classifier_params(weight, bias, **prep_kwargs)

        # Unused forward args (mirroring the PyTorch signature).
        attention_mask = jnp.ones((B, 1), dtype=jnp.float32)
        span_mask = jnp.ones((B, 1), dtype=jnp.float32)
        complementary_mask = jnp.zeros((B, 1), dtype=jnp.float32)
        to_duplicate = jnp.zeros((B,), dtype=jnp.int32)

        loss, logits = wrapper_classifier_forward(
            embeddings, attention_mask, labels, span_mask, complementary_mask,
            to_duplicate, params=params)
        jax.block_until_ready((loss, logits))

        # Pure-JAX reference (logits + mean cross-entropy).
        ref_logits = embeddings @ weight + bias[None, :]
        ref_lse = jax.scipy.special.logsumexp(ref_logits, axis=-1)
        ref_loss = jnp.mean(ref_lse - ref_logits[jnp.arange(B), labels])
        assert logits.shape == (B, C)
        assert jnp.allclose(logits, ref_logits, atol=1e-4, rtol=1e-4)
        assert jnp.allclose(loss, ref_loss, atol=1e-4, rtol=1e-4)

    # Small, clean shapes: single (i, j) tile, fused-K kernel.
    run_check(8, 32, 16)
    # Non-divisible shapes: exercises B/H/C padding to tile multiples (previous bug).
    run_check(10, 200, 40)
    # Force the K-tiled accumulator kernel (3-D grid) with small tiles.
    run_check(8, 256, 16, tile_k=128, k_fuse_threshold=128)

    print("KERNEL_OK")
</pallas_src>

<mosaic_0001>
module attributes {stable_mosaic.version = 11 : i64} {
  func.func @_ce_kernel_fused_k(%arg0: i32, %arg1: i32, %arg2: memref<8x128xf32, #tpu.memory_space<vmem>>, %arg3: memref<128x128xf32, #tpu.memory_space<vmem>>, %arg4: memref<1x128xf32, #tpu.memory_space<vmem>>, %arg5: memref<8x1xi32, #tpu.memory_space<vmem>>, %arg6: memref<8x128xf32, #tpu.memory_space<vmem>>, %arg7: memref<8x1xf32, #tpu.memory_space<vmem>>, %arg8: memref<8x1xf32, #tpu.memory_space<vmem>>, %arg9: memref<8x1xf32, #tpu.memory_space<vmem>>, %arg10: memref<8x1xf32, #tpu.memory_space<vmem>>) attributes {dimension_semantics = [#tpu.dimension_semantics<parallel>, #tpu.dimension_semantics<arbitrary>], iteration_bounds = array<i64: 1, 1>, scalar_prefetch = 0 : i64, scratch_operands = 3 : i64, tpu.core_type = #tpu.core_type<tc>, window_params = [{transform_indices = @transform_0, window_bounds = array<i64: 8, 128>}, {transform_indices = @transform_1, window_bounds = array<i64: 128, 128>}, {transform_indices = @transform_2, window_bounds = array<i64: 1, 128>}, {transform_indices = @transform_3, window_bounds = array<i64: 8, 1>}, {transform_indices = @transform_4, window_bounds = array<i64: 8, 128>}, {transform_indices = @transform_5, window_bounds = array<i64: 8, 1>}]} {
    %c0_i32 = arith.constant 0 : i32
    %0 = arith.cmpi eq, %arg1, %c0_i32 : i32
    %1 = arith.extui %0 : i1 to i32
    %c0_i32_0 = arith.constant 0 : i32
    %2 = arith.cmpi ne, %1, %c0_i32_0 : i32
    scf.if %2 {
      %cst_30 = arith.constant 0xFF800000 : f32
      %45 = vector.broadcast %cst_30 : f32 to vector<8x1xf32>
      %c0_31 = arith.constant 0 : index
      %c0_32 = arith.constant 0 : index
      %46 = vector.load %arg8[%c0_31, %c0_32] : memref<8x1xf32, #tpu.memory_space<vmem>>, vector<8x1xf32>
      tpu.vector_store %arg8[%c0_31, %c0_32], %45 {strides = array<i32>} : memref<8x1xf32, #tpu.memory_space<vmem>>, vector<8x1xf32>,
      %cst_33 = arith.constant 0.000000e+00 : f32
      %47 = vector.broadcast %cst_33 : f32 to vector<8x1xf32>
      %c0_34 = arith.constant 0 : index
      %c0_35 = arith.constant 0 : index
      %48 = vector.load %arg9[%c0_34, %c0_35] : memref<8x1xf32, #tpu.memory_space<vmem>>, vector<8x1xf32>
      tpu.vector_store %arg9[%c0_34, %c0_35], %47 {strides = array<i32>} : memref<8x1xf32, #tpu.memory_space<vmem>>, vector<8x1xf32>,
      %cst_36 = arith.constant 0.000000e+00 : f32
      %49 = vector.broadcast %cst_36 : f32 to vector<8x1xf32>
      %c0_37 = arith.constant 0 : index
      %c0_38 = arith.constant 0 : index
      %50 = vector.load %arg10[%c0_37, %c0_38] : memref<8x1xf32, #tpu.memory_space<vmem>>, vector<8x1xf32>
      tpu.vector_store %arg10[%c0_37, %c0_38], %49 {strides = array<i32>} : memref<8x1xf32, #tpu.memory_space<vmem>>, vector<8x1xf32>,
    } else {
    }
    %c0 = arith.constant 0 : index
    %c0_1 = arith.constant 0 : index
    %3 = vector.load %arg2[%c0, %c0_1] : memref<8x128xf32, #tpu.memory_space<vmem>>, vector<8x128xf32>
    %c0_2 = arith.constant 0 : index
    %c0_3 = arith.constant 0 : index
    %4 = vector.load %arg3[%c0_2, %c0_3] : memref<128x128xf32, #tpu.memory_space<vmem>>, vector<128x128xf32>
    %cst = arith.constant dense<0.000000e+00> : vector<8x128xf32>
    %5 = tpu.matmul %3, %4, %cst {dimension_numbers = #tpu.dot_dimension_numbers<[1], [0], [0], [1], [0, 0, 1, 1], [], []>} : vector<8x128xf32>, vector<128x128xf32>, vector<8x128xf32> -> vector<8x128xf32>
    %c0_4 = arith.constant 0 : index
    %c0_5 = arith.constant 0 : index
    %6 = vector.load %arg4[%c0_4, %c0_5] : memref<1x128xf32, #tpu.memory_space<vmem>>, vector<1x128xf32>
    %7 = vector.broadcast %6 : vector<1x128xf32> to vector<8x128xf32>
    %8 = arith.addf %5, %7 : vector<8x128xf32>
    %c0_6 = arith.constant 0 : index
    %c0_7 = arith.constant 0 : index
    %9 = vector.load %arg6[%c0_6, %c0_7] : memref<8x128xf32, #tpu.memory_space<vmem>>, vector<8x128xf32>
    tpu.vector_store %arg6[%c0_6, %c0_7], %8 {strides = array<i32>} : memref<8x128xf32, #tpu.memory_space<vmem>>, vector<8x128xf32>,
    %cst_8 = arith.constant dense<0xFF800000> : vector<8xf32>
    %10 = vector.multi_reduction <maximumf>, %8, %cst_8 [1] : vector<8x128xf32> to vector<8xf32>
    %11 = vector.shape_cast %10 : vector<8xf32> to vector<8x1xf32>
    %c0_9 = arith.constant 0 : index
    %c0_10 = arith.constant 0 : index
    %12 = vector.load %arg8[%c0_9, %c0_10] : memref<8x1xf32, #tpu.memory_space<vmem>>, vector<8x1xf32>
    %13 = arith.maximumf %12, %11 : vector<8x1xf32>
    %c0_11 = arith.constant 0 : index
    %c0_12 = arith.constant 0 : index
    %14 = vector.load %arg8[%c0_11, %c0_12] : memref<8x1xf32, #tpu.memory_space<vmem>>, vector<8x1xf32>
    %15 = arith.subf %14, %13 : vector<8x1xf32>
    %16 = math.exp %15 : vector<8x1xf32>
    %c0_13 = arith.constant 0 : index
    %c0_14 = arith.constant 0 : index
    %17 = vector.load %arg9[%c0_13, %c0_14] : memref<8x1xf32, #tpu.memory_space<vmem>>, vector<8x1xf32>
    %18 = arith.mulf %16, %17 : vector<8x1xf32>
    %19 = vector.broadcast %13 : vector<8x1xf32> to vector<8x128xf32>
    %20 = arith.subf %8, %19 : vector<8x128xf32>
    %21 = math.exp %20 : vector<8x128xf32>
    %cst_15 = arith.constant dense<0.000000e+00> : vector<8xf32>
    %22 = vector.multi_reduction <add>, %21, %cst_15 [1] : vector<8x128xf32> to vector<8xf32>
    %23 = vector.shape_cast %22 : vector<8xf32> to vector<8x1xf32>
    %24 = arith.addf %18, %23 : vector<8x1xf32>
    %c0_16 = arith.constant 0 : index
    %c0_17 = arith.constant 0 : index
    %25 = vector.load %arg9[%c0_16, %c0_17] : memref<8x1xf32, #tpu.memory_space<vmem>>, vector<8x1xf32>
    tpu.vector_store %arg9[%c0_16, %c0_17], %24 {strides = array<i32>} : memref<8x1xf32, #tpu.memory_space<vmem>>, vector<8x1xf32>,
    %c0_18 = arith.constant 0 : index
    %c0_19 = arith.constant 0 : index
    %26 = vector.load %arg8[%c0_18, %c0_19] : memref<8x1xf32, #tpu.memory_space<vmem>>, vector<8x1xf32>
    tpu.vector_store %arg8[%c0_18, %c0_19], %13 {strides = array<i32>} : memref<8x1xf32, #tpu.memory_space<vmem>>, vector<8x1xf32>,
    %27 = tpu.iota {dimensions = array<i32: 1>} : vector<1x128xi32>
    %c128_i32 = arith.constant 128 : i32
    %28 = arith.muli %arg1, %c128_i32 : i32
    %29 = vector.broadcast %28 : i32 to vector<1x128xi32>
    %30 = arith.addi %27, %29 : vector<1x128xi32>
    %c0_20 = arith.constant 0 : index
    %c0_21 = arith.constant 0 : index
    %31 = vector.load %arg10[%c0_20, %c0_21] : memref<8x1xf32, #tpu.memory_space<vmem>>, vector<8x1xf32>
    %c0_22 = arith.constant 0 : index
    %c0_23 = arith.constant 0 : index
    %32 = vector.load %arg5[%c0_22, %c0_23] : memref<8x1xi32, #tpu.memory_space<vmem>>, vector<8x1xi32>
    %33 = vector.broadcast %30 : vector<1x128xi32> to vector<8x128xi32>
    %34 = vector.broadcast %32 : vector<8x1xi32> to vector<8x128xi32>
    %35 = arith.cmpi eq, %33, %34 : vector<8x128xi32>
    %cst_24 = arith.constant 0.000000e+00 : f32
    %36 = vector.broadcast %cst_24 : f32 to vector<8x128xf32>
    %37 = arith.select %35, %8, %36 : vector<8x128xi1>, vector<8x128xf32>
    %cst_25 = arith.constant dense<0.000000e+00> : vector<8xf32>
    %38 = vector.multi_reduction <add>, %37, %cst_25 [1] : vector<8x128xf32> to vector<8xf32>
    %39 = vector.shape_cast %38 : vector<8xf32> to vector<8x1xf32>
    %40 = arith.addf %31, %39 : vector<8x1xf32>
    %c0_26 = arith.constant 0 : index
    %c0_27 = arith.constant 0 : index
    %41 = vector.load %arg10[%c0_26, %c0_27] : memref<8x1xf32, #tpu.memory_space<vmem>>, vector<8x1xf32>
    tpu.vector_store %arg10[%c0_26, %c0_27], %40 {strides = array<i32>} : memref<8x1xf32, #tpu.memory_space<vmem>>, vector<8x1xf32>,
    %c0_i32_28 = arith.constant 0 : i32
    %42 = arith.cmpi eq, %arg1, %c0_i32_28 : i32
    %43 = arith.extui %42 : i1 to i32
    %c0_i32_29 = arith.constant 0 : i32
    %44 = arith.cmpi ne, %43, %c0_i32_29 : i32
    scf.if %44 {
      %c0_30 = arith.constant 0 : index
      %c0_31 = arith.constant 0 : index
      %45 = vector.load %arg8[%c0_30, %c0_31] : memref<8x1xf32, #tpu.memory_space<vmem>>, vector<8x1xf32>
      %c0_32 = arith.constant 0 : index
      %c0_33 = arith.constant 0 : index
      %46 = vector.load %arg9[%c0_32, %c0_33] : memref<8x1xf32, #tpu.memory_space<vmem>>, vector<8x1xf32>
      %47 = math.log %46 : vector<8x1xf32>
      %48 = arith.addf %45, %47 : vector<8x1xf32>
      %c0_34 = arith.constant 0 : index
      %c0_35 = arith.constant 0 : index
      %49 = vector.load %arg10[%c0_34, %c0_35] : memref<8x1xf32, #tpu.memory_space<vmem>>, vector<8x1xf32>
      %50 = arith.subf %48, %49 : vector<8x1xf32>
      %c0_36 = arith.constant 0 : index
      %c0_37 = arith.constant 0 : index
      %51 = vector.load %arg7[%c0_36, %c0_37] : memref<8x1xf32, #tpu.memory_space<vmem>>, vector<8x1xf32>
      tpu.vector_store %arg7[%c0_36, %c0_37], %50 {strides = array<i32>} : memref<8x1xf32, #tpu.memory_space<vmem>>, vector<8x1xf32>,
    } else {
    }
    return
  }
  func.func @transform_0(%arg0: i32, %arg1: i32) -> (i32, i32) {
    %c0_i32 = arith.constant 0 : i32
    %c0_i32_0 = arith.constant 0 : i32
    return %arg0, %c0_i32 : i32, i32
  }
  func.func @transform_1(%arg0: i32, %arg1: i32) -> (i32, i32) {
    %c0_i32 = arith.constant 0 : i32
    %c0_i32_0 = arith.constant 0 : i32
    return %c0_i32, %arg1 : i32, i32
  }
  func.func @transform_2(%arg0: i32, %arg1: i32) -> (i32, i32) {
    %c0_i32 = arith.constant 0 : i32
    %c0_i32_0 = arith.constant 0 : i32
    return %c0_i32, %arg1 : i32, i32
  }
  func.func @transform_3(%arg0: i32, %arg1: i32) -> (i32, i32) {
    %c0_i32 = arith.constant 0 : i32
    %c0_i32_0 = arith.constant 0 : i32
    return %arg0, %c0_i32 : i32, i32
  }
  func.func @transform_4(%arg0: i32, %arg1: i32) -> (i32, i32) {
    %c0_i32 = arith.constant 0 : i32
    return %arg0, %arg1 : i32, i32
  }
  func.func @transform_5(%arg0: i32, %arg1: i32) -> (i32, i32) {
    %c0_i32 = arith.constant 0 : i32
    %c0_i32_0 = arith.constant 0 : i32
    return %arg0, %c0_i32 : i32, i32
  }
}

</mosaic_0001>

<llo_original>
// kernel: tpu_custom_call.1
$region0: #{tpu_custom_call.1}
  #allocation0 [shape = 'u32[]', space=smem, size = 0x4, offset = 0x4, fixed_abs, tag = 'smem constant byte address 0x4 - core index']
  #allocation1 [shape = 'u32[72,128]{1,0:T(1,128)}', space=vmem, size = 0x9000, scoped, tag = 'internal scratch']
  #allocation2 [shape = 'f32[8,1]{1,0:T(8,128)}', space=vmem, size = 0x1000, scoped, tag = 'scratch operand']
  #allocation3 [shape = 'f32[8,1]{1,0:T(8,128)}', space=vmem, size = 0x1000, scoped, tag = 'scratch operand']
  #allocation4 [shape = 'f32[8,1]{1,0:T(8,128)}', space=vmem, size = 0x1000, scoped, tag = 'scratch operand']
  %s0 = inlined_call_operand.vmem [shape: f32[8,128], index: 0, kind: input, shape index: {}]
  %s1 = inlined_call_operand.hbm [shape: f32[128,128], index: 1, kind: input, shape index: {}]
  %s2 = inlined_call_operand.vmem [shape: f32[1,128], index: 2, kind: input, shape index: {}]
  %s3 = inlined_call_operand.vmem [shape: s32[8,1], index: 3, kind: input, shape index: {}]
  %s4 = inlined_call_operand.hbm [shape: f32[8,128], index: 4, kind: output, shape index: {0}]
  %s5 = inlined_call_operand.vmem [shape: f32[8,1], index: 5, kind: output, shape index: {1}]
  %6 = xla_tuple %s4, %s5
  %s7 = sld [smem:[#allocation0]]
  $region46: #{tpu_custom_call.1} parent=0
    _
  %s9 = ssub.s32 1, %s7
  %s10 = scalar_select 0, %s9, %s7
  $region1: #{tpu_custom_call.1} parent=0
    #allocation5 [shape = 'u8[65536]{0}', space=vmem, size = 0x10000, scoped, tag = 'input window, operand 1, single buffered']
    #allocation6 [shape = 's32[1]{0}', space=sflag, size = 0x4, scoped, tag = 'scoped memory for tpu_custom_call.1']
    #allocation7 [shape = 's32[1]{0}', space=sflag, size = 0x4, scoped, tag = 'scoped memory for tpu_custom_call.1']
    #allocation8 [shape = 'u8[4096]{0}', space=vmem, size = 0x1000, scoped, tag = 'output window, operand 0, single buffered']
    %11 = vsyncpa [#allocation6], 0
    %12 = vsyncpa [#allocation7], 0
    // Predicated region
    $region2: #{tpu_custom_call.1} parent=1 // pred_check
      _
    $region3: #{tpu_custom_call.1} parent=1 // pred_check_branch
      %14 = sbr.rel (0) target = $region5
    $region4: #{tpu_custom_call.1} parent=1 // pred_region
      _
    $region5: #{tpu_custom_call.1} parent=1 // pred_fallthru
      _
    // Predicated region
    $region6: #{tpu_custom_call.1} parent=1 // pred_check
      _
    $region7: #{tpu_custom_call.1} parent=1 // pred_check_branch
      %16 = sbr.rel (0) target = $region9
    $region8: #{tpu_custom_call.1} parent=1 // pred_region
      %18 = vsyncadd [#allocation6], 0
      %s19 = sshll.u32 %s1, 4
      %s20 = int_to_ptr.hbm [resolvable:$true] %s19
      %s21 = sshll.u32 [#allocation5], 4
      %s22 = int_to_ptr.vmem [resolvable:$true] %s21
      %27 = dma.hbm_to_vmem [thread:$0]  %s20, 2048, %s22, [#allocation6], 128, 128, 8
    $region9: #{tpu_custom_call.1} parent=1 // pred_fallthru
      _
    // Predicated region
    $region10: #{tpu_custom_call.1} parent=1 // pred_check
      _
    $region11: #{tpu_custom_call.1} parent=1 // pred_check_branch
      %29 = sbr.rel (0) target = $region13
    $region12: #{tpu_custom_call.1} parent=1 // pred_region
      _
    $region13: #{tpu_custom_call.1} parent=1 // pred_fallthru
      _
    // Predicated region
    $region14: #{tpu_custom_call.1} parent=1 // pred_check
      _
    $region15: #{tpu_custom_call.1} parent=1 // pred_check_branch
      %31 = sbr.rel (0) target = $region17
    $region16: #{tpu_custom_call.1} parent=1 // pred_region
      _
    $region17: #{tpu_custom_call.1} parent=1 // pred_fallthru
      _
    // Predicated region
    $region18: #{tpu_custom_call.1} parent=1 // pred_check
      _
    $region19: #{tpu_custom_call.1} parent=1 // pred_check_branch
      %33 = sbr.rel (0) target = $region21
    $region20: #{tpu_custom_call.1} parent=1 // pred_region
      %35 = dma.done [#allocation6], 2048
    $region21: #{tpu_custom_call.1} parent=1 // pred_fallthru
      _
    %p36 = scmp.eq.s32.totalorder 0, 0
    // Predicated region
    $region22: #{tpu_custom_call.1} parent=1 // pred_check
      %p37 = pneg %p36
    $region23: #{tpu_custom_call.1} parent=1 // pred_check_branch
      %39 = sbr.rel (%p37) target = $region25
    $region24: #{tpu_custom_call.1} parent=1 // pred_region
      %vm40 = vcmask 7168
      %41 = vst.msk [vmem:[#allocation2] sm:$0xff] %vm40, -inf
      %42 = vst.msk [vmem:[#allocation3] sm:$0xff] %vm40, 0.0
      %43 = vst.msk [vmem:[#allocation4] sm:$0xff] %vm40, 0.0
    $region25: #{tpu_custom_call.1} parent=1 // pred_fallthru
      _
    %v44 = vld [vmem:[%s0] sm:$0xff]
    %v45 = vld [vmem:[#allocation5] sm:$0xff]
    %v46 = vld [vmem:[#allocation5 + $0x8] sm:$0xff]
    %v47 = vld [vmem:[#allocation5 + $0x10] sm:$0xff]
    %v48 = vld [vmem:[#allocation5 + $0x18] sm:$0xff]
    %v49 = vld [vmem:[#allocation5 + $0x20] sm:$0xff]
    %v50 = vld [vmem:[#allocation5 + $0x28] sm:$0xff]
    %v51 = vld [vmem:[#allocation5 + $0x30] sm:$0xff]
    %v52 = vld [vmem:[#allocation5 + $0x38] sm:$0xff]
    %v53 = vld [vmem:[#allocation5 + $0x40] sm:$0xff]
    %v54 = vld [vmem:[#allocation5 + $0x48] sm:$0xff]
    %v55 = vld [vmem:[#allocation5 + $0x50] sm:$0xff]
    %v56 = vld [vmem:[#allocation5 + $0x58] sm:$0xff]
    %v57 = vld [vmem:[#allocation5 + $0x60] sm:$0xff]
    %v58 = vld [vmem:[#allocation5 + $0x68] sm:$0xff]
    %v59 = vld [vmem:[#allocation5 + $0x70] sm:$0xff]
    %v60 = vld [vmem:[#allocation5 + $0x78] sm:$0xff]
    %v61 = vld [vmem:[%s2] sm:$0x1]
    %v63 = vperm.slane %v61, 0
    %65 = vmatpush.msra.mxu0 %v60
    %66 = vmatpush.msra.mxu0 %v59
    %67 = vmatpush.msra.mxu0 %v58
    %68 = vmatpush.msra.mxu0 %v57
    %69 = vmatpush.msra.mxu0 %v56
    %70 = vmatpush.msra.mxu0 %v55
    %71 = vmatpush.msra.mxu0 %v54
    %72 = vmatpush.msra.mxu0 %v53
    %73 = vmatpush.msra.mxu0 %v52
    %74 = vmatpush.msra.mxu0 %v51
    %75 = vmatpush.msra.mxu0 %v50
    %76 = vmatpush.msra.mxu0 %v49
    %77 = vmatpush.msra.mxu0 %v48
    %78 = vmatpush.msra.mxu0 %v47
    %79 = vmatpush.msra.mxu0 %v46
    %80 = vmatpush.msra.mxu0 %v45
    %81 = vmatmul.f32.gmra.mxu0 %v44
    %v82 = vpop.f32.mrf.mxu0
    %v83 = vadd.f32 %v63, %v82
    %84 = vdwg.mxu0
    %85 = vst [vmem:[#allocation8] sm:$0xff] %v83
    %86 = vmax.xlane.f32.xlu0 %v83
    %v87 = vpop.xlane.xlu0 %86
    %v88 = vld [vmem:[#allocation2] sm:$0xff]
    %v89 = vmax.f32 %v88, %v87
    %v90 = vsub.f32 %v88, %v89
    %v91 = vmul.f32 %v90, 1.442695
    %v92 = vpow.pop %v91
    %v93 = vld [vmem:[#allocation3] sm:$0xff]
    %v94 = vmul.f32 %v92, %v93
    %96 = vset.pattern.permute.xlu0 0
    %97 = vperm.xlu0 %96, %v89
    %v98 = vpop.permute.xlu0 %97
    %v100 = vsub.f32 %v83, %v98
    %v101 = vmul.f32 %v100, 1.442695
    %v102 = vpow.pop %v101
    %103 = vadd.xlane.f32.xlu0 %v102
    %v104 = vpop.xlane.xlu0 %103
    %v105 = vadd.f32 %v94, %v104
    %vm106 = vcmask 7168
    %107 = vst.msk [vmem:[#allocation3] sm:$0xff] %vm106, %v105
    %108 = vst.msk [vmem:[#allocation2] sm:$0xff] %vm106, %v89
    %v109 = vlaneseq
    %v110 = vand.u32 %v109, 127
    %s111 = smul.u32 0, 128
    %v112 = vstv %s111
    %v113 = vadd.s32 %v110, %v112
    %v114 = vld [vmem:[#allocation4] sm:$0xff]
    %v115 = vld [vmem:[%s3] sm:$0xff]
    %116 = vset.pattern.permute.xlu0 0
    %117 = vperm.xlu0 %116, %v115
    %v118 = vpop.permute.xlu0 %117
    %vm119 = vcmp.eq.s32.totalorder %v113, %v118
    %v120 = vsel %vm119, %v83, 0.0
    %121 = vadd.xlane.f32.xlu0 %v120
    %v122 = vpop.xlane.xlu0 %121
    %v123 = vadd.f32 %v114, %v122
    %124 = vst.msk [vmem:[#allocation4] sm:$0xff] %vm106, %v123
    // Predicated region
    $region26: #{tpu_custom_call.1} parent=1 // pred_check
      %p125 = pneg %p36
    $region27: #{tpu_custom_call.1} parent=1 // pred_check_branch
      %127 = sbr.rel (%p125) target = $region29
    $region28: #{tpu_custom_call.1} parent=1 // pred_region
      %v128 = vld [vmem:[#allocation2] sm:$0xff]
      %v129 = vld [vmem:[#allocation3] sm:$0xff]
      %v130 = vlog2.pop %v129
      %v131 = vmul.f32 %v130, 0.6931472
      %v132 = vadd.f32 %v128, %v131
      %v133 = vld [vmem:[#allocation4] sm:$0xff]
      %v134 = vsub.f32 %v132, %v133
      %135 = vst.msk [vmem:[%s5] sm:$0xff] %vm106, %v134
    $region29: #{tpu_custom_call.1} parent=1 // pred_fallthru
      _
    // Predicated region
    $region30: #{tpu_custom_call.1} parent=1 // pred_check
      _
    $region31: #{tpu_custom_call.1} parent=1 // pred_check_branch
      %137 = sbr.rel (0) target = $region33
    $region32: #{tpu_custom_call.1} parent=1 // pred_region
      %139 = vsyncadd [#allocation7], 0
      %s141 = sshll.u32 [#allocation8], 4
      %s142 = int_to_ptr.vmem [resolvable:$true] %s141
      %s143 = sshll.u32 %s4, 4
      %s144 = int_to_ptr.hbm [resolvable:$true] %s143
      %146 = dma.vmem_to_hbm [thread:$0]  %s142, 128, %s144, [#allocation7]
    $region33: #{tpu_custom_call.1} parent=1 // pred_fallthru
      _
    // Predicated region
    $region34: #{tpu_custom_call.1} parent=1 // pred_check
      _
    $region35: #{tpu_custom_call.1} parent=1 // pred_check_branch
      %148 = sbr.rel (0) target = $region37
    $region36: #{tpu_custom_call.1} parent=1 // pred_region
      _
    $region37: #{tpu_custom_call.1} parent=1 // pred_fallthru
      _
    // Predicated region
    $region38: #{tpu_custom_call.1} parent=1 // pred_check
      _
    $region39: #{tpu_custom_call.1} parent=1 // pred_check_branch
      %150 = sbr.rel (0) target = $region41
    $region40: #{tpu_custom_call.1} parent=1 // pred_region
      %152 = dma.done [#allocation7], 128
    $region41: #{tpu_custom_call.1} parent=1 // pred_fallthru
      _
    // Predicated region
    $region42: #{tpu_custom_call.1} parent=1 // pred_check
      _
    $region43: #{tpu_custom_call.1} parent=1 // pred_check_branch
      %154 = sbr.rel (0) target = $region45
    $region44: #{tpu_custom_call.1} parent=1 // pred_region
      _
    $region45: #{tpu_custom_call.1} parent=1 // pred_fallthru
      _
    %155 = vsyncpa [#allocation6], 1
    %156 = vsyncpa [#allocation7], 1

</llo_original>
